<compile_context>
chip_gen: v7x
topology: tpu7x:2x2x1
jax: 0.10.0
libtpu: 0.0.40
codegen_flags: <defaults>
</compile_context>

<pallas_src>
import functools

import jax
import jax.numpy as jnp
from jax.experimental import pallas as pl
from jax.experimental.pallas import tpu as pltpu


def _round_up(x, m):
    return (x + m - 1) // m * m


def _softplus(x):
    # Matches torch.nn.functional.softplus(x, beta=1, threshold=20).
    return jnp.where(x > 20.0, x, jnp.log1p(jnp.exp(jnp.minimum(x, 20.0))))


def encoder_kernel(x_ref, w1_ref, b1_ref, w2_ref, b2_ref, wh_ref, bh_ref,
                   out_ref, acc_ref):
    """Grid = (batch tiles, vocab tiles). acc_ref: f32 [tb, h_pad] scratch."""
    k = pl.program_id(1)

    @pl.when(k == 0)
    def _():
        # fc1 bias folded into the accumulator init (no finalize add).
        acc_ref[...] = jnp.broadcast_to(b1_ref[...], acc_ref.shape)

    # fc1 partial product for this vocab tile (bf16 in, f32 accumulate).
    acc_ref[...] += jnp.dot(x_ref[...], w1_ref[...],
                            preferred_element_type=jnp.float32)

    @pl.when(k == pl.num_programs(1) - 1)
    def _():
        # softplus(fc1(x))
        h = _softplus(acc_ref[...])

        # softplus(fc2(h))
        h = jnp.dot(h.astype(jnp.bfloat16), w2_ref[...],
                    preferred_element_type=jnp.float32) + b2_ref[...]
        h = _softplus(h)

        # dropout -> identity (eval mode)

        # Fused heads (fcmu || fclv), BatchNorm pre-folded into W/b.
        z = jnp.dot(h.astype(jnp.bfloat16), wh_ref[...],
                    preferred_element_type=jnp.float32) + bh_ref[...]

        t_pad = wh_ref.shape[1] // 2  # static
        out_ref[:, :t_pad] = z[:, :t_pad]                  # logtheta_loc
        out_ref[:, t_pad:] = jnp.exp(0.5 * z[:, t_pad:])   # logtheta_scale


def pack_params(raw, eps=1e-5):
    """Pad to TPU-friendly shapes, fold BN into the heads, fuse the heads,
    cast matmul weights to bf16.  Returns arrays only (no Python ints), so
    the dict can be passed through jit without creating traced dims."""
    vocab, hidden = raw["w1"].shape
    num_topics = raw["wmu"].shape[1]

    # Pad vocab up to a multiple of 512 when large so the reduction tile is
    # always 512/1024-wide (zero columns contribute nothing to the acc).
    v_pad = _round_up(vocab, 512) if vocab > 512 else _round_up(vocab, 128)
    h_pad = _round_up(hidden, 128)
    t_pad = _round_up(num_topics, 128)

    def pad2(a, r, c):
        return jnp.pad(a, ((0, r - a.shape[0]), (0, c - a.shape[1])))

    def pad_row(a, c):
        return jnp.pad(a, (0, c - a.shape[0]))[None, :]

    # Fold affine=False BatchNorm (running stats) into the head weights/biases.
    inv_mu = jax.lax.rsqrt(raw["bnmu_var"] + eps)
    inv_lv = jax.lax.rsqrt(raw["bnlv_var"] + eps)
    wmu_f = raw["wmu"] * inv_mu[None, :]
    wlv_f = raw["wlv"] * inv_lv[None, :]
    bmu_f = (raw["bmu"] - raw["bnmu_mean"]) * inv_mu
    blv_f = (raw["blv"] - raw["bnlv_mean"]) * inv_lv

    w_head = jnp.concatenate(
        [pad2(wmu_f, h_pad, t_pad), pad2(wlv_f, h_pad, t_pad)], axis=1)
    b_head = jnp.concatenate([pad_row(bmu_f, t_pad), pad_row(blv_f, t_pad)],
                             axis=1)

    return {
        "w1": pad2(raw["w1"], v_pad, h_pad).astype(jnp.bfloat16),
        "b1": pad_row(raw["b1"], h_pad).astype(jnp.float32),
        "w2": pad2(raw["w2"], h_pad, h_pad).astype(jnp.bfloat16),
        "b2": pad_row(raw["b2"], h_pad).astype(jnp.float32),
        "w_head": w_head.astype(jnp.bfloat16),
        "b_head": b_head.astype(jnp.float32),
    }


@functools.partial(jax.jit, static_argnames=("num_topics",))
def encoder_forward(x, packed, *, num_topics):
    """x: [B, vocab] f32/bf16.  Returns (logtheta_loc, logtheta_scale),
    each [B, num_topics] f32."""
    B, vocab = x.shape
    v_pad, h_pad = packed["w1"].shape
    t_pad = packed["w_head"].shape[1] // 2

    # --- batch tiling: large tiles so w1 is streamed as few times as
    # possible; keep >=2 tiles when batch is large (v7x dual TensorCores). ---
    b_pad8 = _round_up(B, 8)
    if b_pad8 <= 512:
        tb = b_pad8            # single batch tile (small batch)
    else:
        tb = 512               # >=2 tiles, 512-row w1 reuse per stream
    b_pad = _round_up(b_pad8, tb)

    # --- vocab reduction tile: 512/1024 (v_pad is padded accordingly). ---
    if v_pad <= 512:
        tk = v_pad
    elif v_pad % 1024 == 0:
        tk = 1024
    else:
        tk = 512

    # Pad / cast the input only when actually needed.
    # TODO(synk): have the producer emit bf16, already-padded activations to
    # skip this extra HBM read+write entirely.
    x_bf = x.astype(jnp.bfloat16)
    if (b_pad != B) or (v_pad != vocab):
        x_p = jnp.pad(x_bf, ((0, b_pad - B), (0, v_pad - vocab)))
    else:
        x_p = x_bf

    grid = (b_pad // tb, v_pad // tk)
    n_btiles = grid[0]

    # VMEM footprint estimate (double-buffered streams + single-buffered
    # invariants + scratch) and an explicit limit (<=48 MiB, safe on v7x).
    vmem_est = (2 * tb * tk * 2                     # x tiles (bf16, 2 bufs)
                + 2 * tk * h_pad * 2                # w1 tiles (bf16, 2 bufs)
                + (h_pad * h_pad + h_pad * 2 * t_pad) * 2   # w2 + w_head (1 buf)
                + (3 * h_pad + 4 * t_pad) * 4       # biases
                + tb * h_pad * 4                    # f32 accumulator scratch
                + 2 * tb * 2 * t_pad * 4)           # output tiles (f32, 2 bufs)
    vmem_limit = int(min(48 * 2**20, max(32 * 2**20, int(vmem_est * 1.5))))

    flops = 2 * b_pad * (v_pad * h_pad + h_pad * h_pad + h_pad * 2 * t_pad)
    transcendentals = 2 * b_pad * h_pad + b_pad * t_pad
    bytes_accessed = (x_p.size * 2
                      + packed["w1"].size * 2 * n_btiles   # re-streamed / tile
                      + packed["w2"].size * 2 + packed["w_head"].size * 2
                      + (packed["b1"].size + packed["b2"].size +
                         packed["b_head"].size) * 4
                      + b_pad * 2 * t_pad * 4)

    single = pl.Buffered(1)   # grid-invariant operands: no double-buffering

    out = pl.pallas_call(
        encoder_kernel,
        out_shape=jax.ShapeDtypeStruct((b_pad, 2 * t_pad), jnp.float32),
        grid=grid,
        in_specs=[
            pl.BlockSpec((tb, tk), lambda i, k: (i, k)),                 # x
            pl.BlockSpec((tk, h_pad), lambda i, k: (k, 0)),              # w1
            pl.BlockSpec((1, h_pad), lambda i, k: (0, 0),
                         pipeline_mode=single),                          # b1
            pl.BlockSpec((h_pad, h_pad), lambda i, k: (0, 0),
                         pipeline_mode=single),                          # w2
            pl.BlockSpec((1, h_pad), lambda i, k: (0, 0),
                         pipeline_mode=single),                          # b2
            pl.BlockSpec((h_pad, 2 * t_pad), lambda i, k: (0, 0),
                         pipeline_mode=single),                          # w_head
            pl.BlockSpec((1, 2 * t_pad), lambda i, k: (0, 0),
                         pipeline_mode=single),                          # b_head
        ],
        out_specs=pl.BlockSpec((tb, 2 * t_pad), lambda i, k: (i, 0)),
        scratch_shapes=[pltpu.VMEM((tb, h_pad), jnp.float32)],
        compiler_params=pltpu.CompilerParams(
            dimension_semantics=("parallel", "arbitrary"),
            vmem_limit_bytes=vmem_limit),
        cost_estimate=pl.CostEstimate(flops=flops,
                                      transcendentals=transcendentals,
                                      bytes_accessed=bytes_accessed),
    )(x_p, packed["w1"], packed["b1"], packed["w2"], packed["b2"],
      packed["w_head"], packed["b_head"])

    # B and num_topics are static here (shape / static_argnames), so this
    # slicing is legal under jit.
    loc = out[:B, :num_topics]
    scale = out[:B, t_pad:t_pad + num_topics]
    return loc, scale


def init_params(key, vocab_size, num_topics, hidden):
    """PyTorch-Linear-like init (uniform(+/-1/sqrt(fan_in))); BN running
    stats made non-trivial so the folding is actually exercised."""
    keys = jax.random.split(key, 12)

    def linear(kw, kb, fan_in, fan_out):
        bound = 1.0 / jnp.sqrt(jnp.float32(fan_in))
        w = jax.random.uniform(kw, (fan_in, fan_out), jnp.float32, -bound, bound)
        b = jax.random.uniform(kb, (fan_out,), jnp.float32, -bound, bound)
        return w, b

    w1, b1 = linear(keys[0], keys[1], vocab_size, hidden)
    w2, b2 = linear(keys[2], keys[3], hidden, hidden)
    wmu, bmu = linear(keys[4], keys[5], hidden, num_topics)
    wlv, blv = linear(keys[6], keys[7], hidden, num_topics)

    return {
        "w1": w1, "b1": b1,
        "w2": w2, "b2": b2,
        "wmu": wmu, "bmu": bmu,
        "wlv": wlv, "blv": blv,
        "bnmu_mean": 0.1 * jax.random.normal(keys[8], (num_topics,)),
        "bnmu_var": jax.random.uniform(keys[9], (num_topics,), jnp.float32,
                                       0.5, 1.5),
        "bnlv_mean": 0.1 * jax.random.normal(keys[10], (num_topics,)),
        "bnlv_var": jax.random.uniform(keys[11], (num_topics,), jnp.float32,
                                       0.5, 1.5),
    }


def reference_forward(x, raw, eps=1e-5):
    """Pure-JAX f32 reference of the eval-mode PyTorch forward."""
    h = _softplus(x @ raw["w1"] + raw["b1"])
    h = _softplus(h @ raw["w2"] + raw["b2"])
    mu = h @ raw["wmu"] + raw["bmu"]
    lv = h @ raw["wlv"] + raw["blv"]
    loc = (mu - raw["bnmu_mean"]) * jax.lax.rsqrt(raw["bnmu_var"] + eps)
    lvn = (lv - raw["bnlv_mean"]) * jax.lax.rsqrt(raw["bnlv_var"] + eps)
    return loc, jnp.exp(0.5 * lvn)


if __name__ == "__main__":
    vocab_size, num_topics, hidden = 64, 16, 32
    batch = 8

    key = jax.random.PRNGKey(0)
    kx, kp = jax.random.split(key)

    # Bag-of-words style non-negative counts as input.
    x = jax.random.poisson(kx, 2.0, (batch, vocab_size)).astype(jnp.float32)
    raw = init_params(kp, vocab_size, num_topics, hidden)
    packed = pack_params(raw)

    loc, scale = encoder_forward(x, packed, num_topics=num_topics)
    jax.block_until_ready((loc, scale))

    assert loc.shape == (batch, num_topics)
    assert scale.shape == (batch, num_topics)
    assert bool(jnp.all(scale > 0))

    # Loose tolerance: kernel uses bf16 matmul inputs with f32 accumulation.
    ref_loc, ref_scale = reference_forward(x, raw)
    assert bool(jnp.allclose(loc, ref_loc, atol=1e-1, rtol=1e-1))
    assert bool(jnp.allclose(scale, ref_scale, atol=1e-1, rtol=1e-1))

    print("KERNEL_OK")
</pallas_src>

<mosaic_0001>
module attributes {stable_mosaic.version = 11 : i64} {
  func.func @encoder_kernel(%arg0: i32, %arg1: i32, %arg2: memref<8x128xbf16, #tpu.memory_space<vmem>>, %arg3: memref<128x128xbf16, #tpu.memory_space<vmem>>, %arg4: memref<1x128xf32, #tpu.memory_space<vmem>>, %arg5: memref<128x128xbf16, #tpu.memory_space<vmem>>, %arg6: memref<1x128xf32, #tpu.memory_space<vmem>>, %arg7: memref<128x256xbf16, #tpu.memory_space<vmem>>, %arg8: memref<1x256xf32, #tpu.memory_space<vmem>>, %arg9: memref<8x256xf32, #tpu.memory_space<vmem>>, %arg10: memref<8x128xf32, #tpu.memory_space<vmem>>) attributes {dimension_semantics = [#tpu.dimension_semantics<parallel>, #tpu.dimension_semantics<arbitrary>], iteration_bounds = array<i64: 1, 1>, scalar_prefetch = 0 : i64, scratch_operands = 1 : i64, tpu.core_type = #tpu.core_type<tc>, window_params = [{transform_indices = @transform_0, window_bounds = array<i64: 8, 128>}, {transform_indices = @transform_1, window_bounds = array<i64: 128, 128>}, {pipeline_mode = #tpu.pipeline_mode<synchronous>, transform_indices = @transform_2, window_bounds = array<i64: 1, 128>}, {pipeline_mode = #tpu.pipeline_mode<synchronous>, transform_indices = @transform_3, window_bounds = array<i64: 128, 128>}, {pipeline_mode = #tpu.pipeline_mode<synchronous>, transform_indices = @transform_4, window_bounds = array<i64: 1, 128>}, {pipeline_mode = #tpu.pipeline_mode<synchronous>, transform_indices = @transform_5, window_bounds = array<i64: 128, 256>}, {pipeline_mode = #tpu.pipeline_mode<synchronous>, transform_indices = @transform_6, window_bounds = array<i64: 1, 256>}, {transform_indices = @transform_7, window_bounds = array<i64: 8, 256>}]} {
    %c0_i32 = arith.constant 0 : i32
    %0 = arith.cmpi eq, %arg1, %c0_i32 : i32
    %1 = arith.extui %0 : i1 to i32
    %c0_i32_0 = arith.constant 0 : i32
    %2 = arith.cmpi ne, %1, %c0_i32_0 : i32
    scf.if %2 {
      %c0_10 = arith.constant 0 : index
      %c0_11 = arith.constant 0 : index
      %12 = vector.load %arg4[%c0_10, %c0_11] : memref<1x128xf32, #tpu.memory_space<vmem>>, vector<1x128xf32>
      %13 = vector.shape_cast %12 : vector<1x128xf32> to vector<1x128xf32>
      %14 = vector.broadcast %13 : vector<1x128xf32> to vector<8x128xf32>
      %c0_12 = arith.constant 0 : index
      %c0_13 = arith.constant 0 : index
      %15 = vector.load %arg10[%c0_12, %c0_13] : memref<8x128xf32, #tpu.memory_space<vmem>>, vector<8x128xf32>
      tpu.vector_store %arg10[%c0_12, %c0_13], %14 {strides = array<i32>} : memref<8x128xf32, #tpu.memory_space<vmem>>, vector<8x128xf32>,
    } else {
    }
    %c0 = arith.constant 0 : index
    %c0_1 = arith.constant 0 : index
    %3 = vector.load %arg10[%c0, %c0_1] : memref<8x128xf32, #tpu.memory_space<vmem>>, vector<8x128xf32>
    %c0_2 = arith.constant 0 : index
    %c0_3 = arith.constant 0 : index
    %4 = vector.load %arg2[%c0_2, %c0_3] : memref<8x128xbf16, #tpu.memory_space<vmem>>, vector<8x128xbf16>
    %c0_4 = arith.constant 0 : index
    %c0_5 = arith.constant 0 : index
    %5 = vector.load %arg3[%c0_4, %c0_5] : memref<128x128xbf16, #tpu.memory_space<vmem>>, vector<128x128xbf16>
    %cst = arith.constant dense<0.000000e+00> : vector<8x128xf32>
    %6 = tpu.matmul %4, %5, %cst {dimension_numbers = #tpu.dot_dimension_numbers<[1], [0], [0], [1], [0, 0, 1, 1], [], []>} : vector<8x128xbf16>, vector<128x128xbf16>, vector<8x128xf32> -> vector<8x128xf32>
    %7 = arith.addf %3, %6 : vector<8x128xf32>
    %c0_6 = arith.constant 0 : index
    %c0_7 = arith.constant 0 : index
    %8 = vector.load %arg10[%c0_6, %c0_7] : memref<8x128xf32, #tpu.memory_space<vmem>>, vector<8x128xf32>
    tpu.vector_store %arg10[%c0_6, %c0_7], %7 {strides = array<i32>} : memref<8x128xf32, #tpu.memory_space<vmem>>, vector<8x128xf32>,
    %c0_i32_8 = arith.constant 0 : i32
    %9 = arith.cmpi eq, %arg1, %c0_i32_8 : i32
    %10 = arith.extui %9 : i1 to i32
    %c0_i32_9 = arith.constant 0 : i32
    %11 = arith.cmpi ne, %10, %c0_i32_9 : i32
    scf.if %11 {
      %c0_10 = arith.constant 0 : index
      %c0_11 = arith.constant 0 : index
      %12 = vector.load %arg10[%c0_10, %c0_11] : memref<8x128xf32, #tpu.memory_space<vmem>>, vector<8x128xf32>
      %cst_12 = arith.constant 2.000000e+01 : f32
      %13 = vector.broadcast %cst_12 : f32 to vector<8x128xf32>
      %14 = arith.cmpf ogt, %12, %13 : vector<8x128xf32>
      %cst_13 = arith.constant 2.000000e+01 : f32
      %15 = vector.broadcast %cst_13 : f32 to vector<8x128xf32>
      %16 = arith.minimumf %12, %15 : vector<8x128xf32>
      %17 = math.exp %16 : vector<8x128xf32>
      %18 = math.log1p %17 : vector<8x128xf32>
      %19 = arith.select %14, %12, %18 : vector<8x128xi1>, vector<8x128xf32>
      %20 = arith.truncf %19 : vector<8x128xf32> to vector<8x128xbf16>
      %c0_14 = arith.constant 0 : index
      %c0_15 = arith.constant 0 : index
      %21 = vector.load %arg5[%c0_14, %c0_15] : memref<128x128xbf16, #tpu.memory_space<vmem>>, vector<128x128xbf16>
      %cst_16 = arith.constant dense<0.000000e+00> : vector<8x128xf32>
      %22 = tpu.matmul %20, %21, %cst_16 {dimension_numbers = #tpu.dot_dimension_numbers<[1], [0], [0], [1], [0, 0, 1, 1], [], []>} : vector<8x128xbf16>, vector<128x128xbf16>, vector<8x128xf32> -> vector<8x128xf32>
      %c0_17 = arith.constant 0 : index
      %c0_18 = arith.constant 0 : index
      %23 = vector.load %arg6[%c0_17, %c0_18] : memref<1x128xf32, #tpu.memory_space<vmem>>, vector<1x128xf32>
      %24 = vector.broadcast %23 : vector<1x128xf32> to vector<8x128xf32>
      %25 = arith.addf %22, %24 : vector<8x128xf32>
      %cst_19 = arith.constant 2.000000e+01 : f32
      %26 = vector.broadcast %cst_19 : f32 to vector<8x128xf32>
      %27 = arith.cmpf ogt, %25, %26 : vector<8x128xf32>
      %cst_20 = arith.constant 2.000000e+01 : f32
      %28 = vector.broadcast %cst_20 : f32 to vector<8x128xf32>
      %29 = arith.minimumf %25, %28 : vector<8x128xf32>
      %30 = math.exp %29 : vector<8x128xf32>
      %31 = math.log1p %30 : vector<8x128xf32>
      %32 = arith.select %27, %25, %31 : vector<8x128xi1>, vector<8x128xf32>
      %33 = arith.truncf %32 : vector<8x128xf32> to vector<8x128xbf16>
      %c0_21 = arith.constant 0 : index
      %c0_22 = arith.constant 0 : index
      %34 = vector.load %arg7[%c0_21, %c0_22] : memref<128x256xbf16, #tpu.memory_space<vmem>>, vector<128x256xbf16>
      %cst_23 = arith.constant dense<0.000000e+00> : vector<8x256xf32>
      %35 = tpu.matmul %33, %34, %cst_23 {dimension_numbers = #tpu.dot_dimension_numbers<[1], [0], [0], [1], [0, 0, 1, 1], [], []>} : vector<8x128xbf16>, vector<128x256xbf16>, vector<8x256xf32> -> vector<8x256xf32>
      %c0_24 = arith.constant 0 : index
      %c0_25 = arith.constant 0 : index
      %36 = vector.load %arg8[%c0_24, %c0_25] : memref<1x256xf32, #tpu.memory_space<vmem>>, vector<1x256xf32>
      %37 = vector.broadcast %36 : vector<1x256xf32> to vector<8x256xf32>
      %38 = arith.addf %35, %37 : vector<8x256xf32>
      %39 = vector.extract_strided_slice %38 {offsets = [0, 0], sizes = [8, 128], strides = [1, 1]} : vector<8x256xf32> to vector<8x128xf32>
      %c0_26 = arith.constant 0 : index
      %c0_27 = arith.constant 0 : index
      %40 = vector.load %arg9[%c0_26, %c0_27] : memref<8x256xf32, #tpu.memory_space<vmem>>, vector<8x128xf32>
      tpu.vector_store %arg9[%c0_26, %c0_27], %39 {strides = array<i32>} : memref<8x256xf32, #tpu.memory_space<vmem>>, vector<8x128xf32>,
      %41 = vector.extract_strided_slice %38 {offsets = [0, 128], sizes = [8, 128], strides = [1, 1]} : vector<8x256xf32> to vector<8x128xf32>
      %cst_28 = arith.constant 5.000000e-01 : f32
      %42 = vector.broadcast %cst_28 : f32 to vector<8x128xf32>
      %43 = arith.mulf %42, %41 : vector<8x128xf32>
      %44 = math.exp %43 : vector<8x128xf32>
      %c0_29 = arith.constant 0 : index
      %c128 = arith.constant 128 : index
      %45 = vector.load %arg9[%c0_29, %c128] : memref<8x256xf32, #tpu.memory_space<vmem>>, vector<8x128xf32>
      tpu.vector_store %arg9[%c0_29, %c128], %44 {strides = array<i32>} : memref<8x256xf32, #tpu.memory_space<vmem>>, vector<8x128xf32>,
    } else {
    }
    return
  }
  func.func @transform_0(%arg0: i32, %arg1: i32) -> (i32, i32) {
    %c0_i32 = arith.constant 0 : i32
    return %arg0, %arg1 : i32, i32
  }
  func.func @transform_1(%arg0: i32, %arg1: i32) -> (i32, i32) {
    %c0_i32 = arith.constant 0 : i32
    %c0_i32_0 = arith.constant 0 : i32
    return %arg1, %c0_i32 : i32, i32
  }
  func.func @transform_2(%arg0: i32, %arg1: i32) -> (i32, i32) {
    %c0_i32 = arith.constant 0 : i32
    %c0_i32_0 = arith.constant 0 : i32
    %c0_i32_1 = arith.constant 0 : i32
    return %c0_i32, %c0_i32_0 : i32, i32
  }
  func.func @transform_3(%arg0: i32, %arg1: i32) -> (i32, i32) {
    %c0_i32 = arith.constant 0 : i32
    %c0_i32_0 = arith.constant 0 : i32
    %c0_i32_1 = arith.constant 0 : i32
    return %c0_i32, %c0_i32_0 : i32, i32
  }
  func.func @transform_4(%arg0: i32, %arg1: i32) -> (i32, i32) {
    %c0_i32 = arith.constant 0 : i32
    %c0_i32_0 = arith.constant 0 : i32
    %c0_i32_1 = arith.constant 0 : i32
    return %c0_i32, %c0_i32_0 : i32, i32
  }
  func.func @transform_5(%arg0: i32, %arg1: i32) -> (i32, i32) {
    %c0_i32 = arith.constant 0 : i32
    %c0_i32_0 = arith.constant 0 : i32
    %c0_i32_1 = arith.constant 0 : i32
    return %c0_i32, %c0_i32_0 : i32, i32
  }
  func.func @transform_6(%arg0: i32, %arg1: i32) -> (i32, i32) {
    %c0_i32 = arith.constant 0 : i32
    %c0_i32_0 = arith.constant 0 : i32
    %c0_i32_1 = arith.constant 0 : i32
    return %c0_i32, %c0_i32_0 : i32, i32
  }
  func.func @transform_7(%arg0: i32, %arg1: i32) -> (i32, i32) {
    %c0_i32 = arith.constant 0 : i32
    %c0_i32_0 = arith.constant 0 : i32
    return %arg0, %c0_i32 : i32, i32
  }
}

</mosaic_0001>

<llo_original>
// kernel: encoder_forward.1
$region0: #{encoder_forward.1}
  #allocation0 [shape = 'u32[]', space=smem, size = 0x4, offset = 0x4, fixed_abs, tag = 'smem constant byte address 0x4 - core index']
  #allocation1 [shape = 'u32[144,128]{1,0:T(1,128)}', space=vmem, size = 0x12000, scoped, tag = 'internal scratch']
  #allocation2 [shape = 'f32[8,128]{1,0:T(8,128)}', space=vmem, size = 0x1000, scoped, tag = 'scratch operand']
  %s0 = inlined_call_operand.vmem [shape: bf16[8,128], index: 0, kind: input, shape index: {}]
  %s1 = inlined_call_operand.hbm [shape: bf16[128,128], index: 1, kind: input, shape index: {}]
  %s2 = inlined_call_operand.vmem [shape: f32[1,128], index: 2, kind: input, shape index: {}]
  %s3 = inlined_call_operand.hbm [shape: bf16[128,128], index: 3, kind: input, shape index: {}]
  %s4 = inlined_call_operand.vmem [shape: f32[1,128], index: 4, kind: input, shape index: {}]
  %s5 = inlined_call_operand.hbm [shape: bf16[128,256], index: 5, kind: input, shape index: {}]
  %s6 = inlined_call_operand.vmem [shape: f32[1,256], index: 6, kind: input, shape index: {}]
  %s7 = inlined_call_operand.vmem [shape: f32[8,256], index: 7, kind: output, shape index: {}]
  %s8 = sld [smem:[#allocation0]]
  $region58: #{encoder_forward.1} parent=0
    _
  %s10 = ssub.s32 1, %s8
  %s11 = scalar_select 0, %s10, %s8
  $region1: #{encoder_forward.1} parent=0
    #allocation3 [shape = 'u8[32768]{0}', space=vmem, size = 0x8000, scoped, tag = 'input window, operand 1, single buffered']
    #allocation4 [shape = 's32[1]{0}', space=sflag, size = 0x4, scoped, tag = 'scoped memory for encoder_forward.1']
    #allocation5 [shape = 'u8[32768]{0}', space=vmem, size = 0x8000, scoped, tag = 'input window, operand 3, single buffered']
    #allocation6 [shape = 's32[1]{0}', space=sflag, size = 0x4, scoped, tag = 'scoped memory for encoder_forward.1']
    #allocation7 [shape = 'u8[65536]{0}', space=vmem, size = 0x10000, scoped, tag = 'input window, operand 5, single buffered']
    %12 = vsyncpa [#allocation4], 0
    %13 = vsyncpa [#allocation6], 0
    // Predicated region
    $region2: #{encoder_forward.1} parent=1 // pred_check
      _
    $region3: #{encoder_forward.1} parent=1 // pred_check_branch
      %15 = sbr.rel (0) target = $region5
    $region4: #{encoder_forward.1} parent=1 // pred_region
      _
    $region5: #{encoder_forward.1} parent=1 // pred_fallthru
      _
    // Predicated region
    $region6: #{encoder_forward.1} parent=1 // pred_check
      _
    $region7: #{encoder_forward.1} parent=1 // pred_check_branch
      %17 = sbr.rel (0) target = $region9
    $region8: #{encoder_forward.1} parent=1 // pred_region
      %s19 = ssub.s32 1024, 1024
      %20 = vsyncadd [#allocation4], %s19
      %s21 = sshll.u32 [#allocation3], 4
      %s22 = int_to_ptr.vmem [resolvable:$true] %s21
      %27 = dma.hbm_to_vmem [thread:$0]  %s1, 1024, %s22, [#allocation4], 64, 64, 4
    $region9: #{encoder_forward.1} parent=1 // pred_fallthru
      _
    // Predicated region
    $region10: #{encoder_forward.1} parent=1 // pred_check
      _
    $region11: #{encoder_forward.1} parent=1 // pred_check_branch
      %29 = sbr.rel (0) target = $region13
    $region12: #{encoder_forward.1} parent=1 // pred_region
      _
    $region13: #{encoder_forward.1} parent=1 // pred_fallthru
      _
    // Predicated region
    $region14: #{encoder_forward.1} parent=1 // pred_check
      _
    $region15: #{encoder_forward.1} parent=1 // pred_check_branch
      %31 = sbr.rel (0) target = $region17
    $region16: #{encoder_forward.1} parent=1 // pred_region
      %s33 = ssub.s32 1024, 1024
      %34 = vsyncadd [#allocation6], %s33
      %s35 = sshll.u32 [#allocation5], 4
      %s36 = int_to_ptr.vmem [resolvable:$true] %s35
      %41 = dma.hbm_to_vmem [thread:$0]  %s3, 1024, %s36, [#allocation6], 64, 64, 4
    $region17: #{encoder_forward.1} parent=1 // pred_fallthru
      _
    // Predicated region
    $region18: #{encoder_forward.1} parent=1 // pred_check
      _
    $region19: #{encoder_forward.1} parent=1 // pred_check_branch
      %43 = sbr.rel (0) target = $region21
    $region20: #{encoder_forward.1} parent=1 // pred_region
      _
    $region21: #{encoder_forward.1} parent=1 // pred_fallthru
      _
    // Predicated region
    $region22: #{encoder_forward.1} parent=1 // pred_check
      _
    $region23: #{encoder_forward.1} parent=1 // pred_check_branch
      %45 = sbr.rel (0) target = $region25
    $region24: #{encoder_forward.1} parent=1 // pred_region
      %s47 = ssub.s32 2048, 2048
      %48 = vsyncadd [#allocation6], %s47
      %s49 = sshll.u32 [#allocation7], 4
      %s50 = int_to_ptr.vmem [resolvable:$true] %s49
      %55 = dma.hbm_to_vmem [thread:$0]  %s5, 2048, %s50, [#allocation6], 128, 128, 8
    $region25: #{encoder_forward.1} parent=1 // pred_fallthru
      _
    // Predicated region
    $region26: #{encoder_forward.1} parent=1 // pred_check
      _
    $region27: #{encoder_forward.1} parent=1 // pred_check_branch
      %57 = sbr.rel (0) target = $region29
    $region28: #{encoder_forward.1} parent=1 // pred_region
      _
    $region29: #{encoder_forward.1} parent=1 // pred_fallthru
      _
    // Predicated region
    $region30: #{encoder_forward.1} parent=1 // pred_check
      _
    $region31: #{encoder_forward.1} parent=1 // pred_check_branch
      %59 = sbr.rel (0) target = $region33
    $region32: #{encoder_forward.1} parent=1 // pred_region
      %60 = dma.done [#allocation4], 1024
    $region33: #{encoder_forward.1} parent=1 // pred_fallthru
      _
    // Predicated region
    $region34: #{encoder_forward.1} parent=1 // pred_check
      _
    $region35: #{encoder_forward.1} parent=1 // pred_check_branch
      %62 = sbr.rel (0) target = $region37
    $region36: #{encoder_forward.1} parent=1 // pred_region
      %63 = dma.done [#allocation6], 1024
    $region37: #{encoder_forward.1} parent=1 // pred_fallthru
      _
    // Predicated region
    $region38: #{encoder_forward.1} parent=1 // pred_check
      _
    $region39: #{encoder_forward.1} parent=1 // pred_check_branch
      %65 = sbr.rel (0) target = $region41
    $region40: #{encoder_forward.1} parent=1 // pred_region
      %66 = dma.done [#allocation6], 2048
    $region41: #{encoder_forward.1} parent=1 // pred_fallthru
      _
    %p68 = scmp.eq.s32.totalorder 0, 0
    // Predicated region
    $region42: #{encoder_forward.1} parent=1 // pred_check
      %p69 = pneg %p68
    $region43: #{encoder_forward.1} parent=1 // pred_check_branch
      %71 = sbr.rel (%p69) target = $region45
    $region44: #{encoder_forward.1} parent=1 // pred_region
      %v72 = vld [vmem:[%s2] sm:$0x1]
      %v74 = vlaneseq
      %v75 = vshrl.u32 %v74, 7
      %v76 = vsub.s32 0, %v75
      %v77 = vrot.slane %v72, %v76
      %79 = vst [vmem:[#allocation2] sm:$0xff] %v77
    $region45: #{encoder_forward.1} parent=1 // pred_fallthru
      _
    %v80 = vld [vmem:[#allocation2] sm:$0xff]
    %v81 = vld [vmem:[%s0] sm:$0xf]
    %v82 = vld [vmem:[#allocation3] sm:$0xf]
    %v83 = vld [vmem:[#allocation3 + $0x4] sm:$0xf]
    %v84 = vld [vmem:[#allocation3 + $0x8] sm:$0xf]
    %v85 = vld [vmem:[#allocation3 + $0xc] sm:$0xf]
    %v86 = vld [vmem:[#allocation3 + $0x10] sm:$0xf]
    %v87 = vld [vmem:[#allocation3 + $0x14] sm:$0xf]
    %v88 = vld [vmem:[#allocation3 + $0x18] sm:$0xf]
    %v89 = vld [vmem:[#allocation3 + $0x1c] sm:$0xf]
    %v90 = vld [vmem:[#allocation3 + $0x20] sm:$0xf]
    %v91 = vld [vmem:[#allocation3 + $0x24] sm:$0xf]
    %v92 = vld [vmem:[#allocation3 + $0x28] sm:$0xf]
    %v93 = vld [vmem:[#allocation3 + $0x2c] sm:$0xf]
    %v94 = vld [vmem:[#allocation3 + $0x30] sm:$0xf]
    %v95 = vld [vmem:[#allocation3 + $0x34] sm:$0xf]
    %v96 = vld [vmem:[#allocation3 + $0x38] sm:$0xf]
    %v97 = vld [vmem:[#allocation3 + $0x3c] sm:$0xf]
    %v114 = vunpack.c.l.b16 %v82
    %v115 = vunpack.c.l.b16 %v83
    %v116 = vunpack.c.l.b16 %v84
    %v117 = vunpack.c.l.b16 %v85
    %v118 = vunpack.c.l.b16 %v86
    %v119 = vunpack.c.l.b16 %v87
    %v120 = vunpack.c.l.b16 %v88
    %v121 = vunpack.c.l.b16 %v89
    %v122 = vunpack.c.l.b16 %v90
    %v123 = vunpack.c.l.b16 %v91
    %v124 = vunpack.c.l.b16 %v92
    %v125 = vunpack.c.l.b16 %v93
    %v126 = vunpack.c.l.b16 %v94
    %v127 = vunpack.c.l.b16 %v95
    %v128 = vunpack.c.l.b16 %v96
    %v129 = vunpack.c.l.b16 %v97
    %v130 = vpack.c.b16 %v115, %v114
    %v131 = vpack.c.b16 %v117, %v116
    %v132 = vpack.c.b16 %v119, %v118
    %v133 = vpack.c.b16 %v121, %v120
    %v134 = vpack.c.b16 %v123, %v122
    %v135 = vpack.c.b16 %v125, %v124
    %v136 = vpack.c.b16 %v127, %v126
    %v137 = vpack.c.b16 %v129, %v128
    %146 = vmatprep.subr.bf16.mxu0 0
    %147 = vmatpush1.bf16.msra.mxu0 %v130
    %148 = vmatprep.subr.bf16.mxu0 0
    %149 = vmatpush1.bf16.msra.mxu0 %v131
    %150 = vmatprep.subr.bf16.mxu0 0
    %151 = vmatpush1.bf16.msra.mxu0 %v132
    %152 = vmatprep.subr.bf16.mxu0 0
    %153 = vmatpush1.bf16.msra.mxu0 %v133
    %154 = vmatprep.subr.bf16.mxu0 0
    %155 = vmatpush1.bf16.msra.mxu0 %v134
    %156 = vmatprep.subr.bf16.mxu0 0
    %157 = vmatpush1.bf16.msra.mxu0 %v135
    %158 = vmatprep.subr.bf16.mxu0 0
    %159 = vmatpush1.bf16.msra.mxu0 %v136
    %160 = vmatprep.subr.bf16.mxu0 0
    %161 = vmatpush1.bf16.msra.mxu0 %v137
    %162 = vmatprep.subr.bf16.mxu0 0
    %163 = vmatpush1.bf16.msra.mxu0 0
    %164 = vmatprep.subr.bf16.mxu0 0
    %165 = vmatpush1.bf16.msra.mxu0 0
    %166 = vmatprep.subr.bf16.mxu0 0
    %167 = vmatpush1.bf16.msra.mxu0 0
    %168 = vmatprep.subr.bf16.mxu0 0
    %169 = vmatpush1.bf16.msra.mxu0 0
    %170 = vmatprep.subr.bf16.mxu0 0
    %171 = vmatpush1.bf16.msra.mxu0 0
    %172 = vmatprep.subr.bf16.mxu0 0
    %173 = vmatpush1.bf16.msra.mxu0 0
    %174 = vmatprep.subr.bf16.mxu0 0
    %175 = vmatpush1.bf16.msra.mxu0 0
    %176 = vmatprep.subr.bf16.mxu0 0
    %177 = vmatpush1.bf16.msra.mxu0 0
    %178 = vmatprep.mubr.bf16.mxu0 0
    %179 = vmatmul.mubr.bf16.gmra.mrb[0].mxu0 %v81
    %v180 = vpop.f32.mrb[0].mxu0
    %v181 = vadd.f32 0.0, %v180
    %v182 = vpop.f32.mrb[0].mxu0
    %v183 = vpop.f32.mrb[0].mxu0
    %v184 = vpop.f32.mrb[0].mxu0
    %185 = vdwg.mxu0
    %v186 = vadd.f32 %v80, %v181
    %187 = vst [vmem:[#allocation2] sm:$0xff] %v186
    // Predicated region
    $region46: #{encoder_forward.1} parent=1 // pred_check
      %p188 = pneg %p68
    $region47: #{encoder_forward.1} parent=1 // pred_check_branch
      %190 = sbr.rel (%p188) target = $region49
    $region48: #{encoder_forward.1} parent=1 // pred_region
      %v191 = vld [vmem:[#allocation2] sm:$0xff]
      %vm192 = vcmp.gt.f32.partialorder %v191, 20.0
      %v193 = vmin.f32 %v191, 20.0
      %v194 = vmul.f32 %v193, 1.442695
      %v195 = vpow.pop %v194
      %v196 = vadd.f32 %v195, 1.0
      %v197 = vlog2.pop %v196
      %v198 = vmul.f32 %v197, 0.6931472
      %v199 = vmul.f32 -0.5, %v195
      %v200 = vadd.f32 %v199, 1.0
      %v201 = vmul.f32 %v200, %v195
      %v202 = vand.u32 2147483647, %v195
      %vm203 = vcmp.lt.f32.partialorder %v202, 0.0004427343
      %v204 = vsel %vm203, %v201, %v198
      %v205 = vsel %vm192, %v191, %v204
      %v206 = vpack.c.bf16 %v205, %v205
      %v207 = vld [vmem:[#allocation5] sm:$0xf]
      %v208 = vld [vmem:[#allocation5 + $0x4] sm:$0xf]
      %v209 = vld [vmem:[#allocation5 + $0x8] sm:$0xf]
      %v210 = vld [vmem:[#allocation5 + $0xc] sm:$0xf]
      %v211 = vld [vmem:[#allocation5 + $0x10] sm:$0xf]
      %v212 = vld [vmem:[#allocation5 + $0x14] sm:$0xf]
      %v213 = vld [vmem:[#allocation5 + $0x18] sm:$0xf]
      %v214 = vld [vmem:[#allocation5 + $0x1c] sm:$0xf]
      %v215 = vld [vmem:[#allocation5 + $0x20] sm:$0xf]
      %v216 = vld [vmem:[#allocation5 + $0x24] sm:$0xf]
      %v217 = vld [vmem:[#allocation5 + $0x28] sm:$0xf]
      %v218 = vld [vmem:[#allocation5 + $0x2c] sm:$0xf]
      %v219 = vld [vmem:[#allocation5 + $0x30] sm:$0xf]
      %v220 = vld [vmem:[#allocation5 + $0x34] sm:$0xf]
      %v221 = vld [vmem:[#allocation5 + $0x38] sm:$0xf]
      %v222 = vld [vmem:[#allocation5 + $0x3c] sm:$0xf]
      %v223 = vld [vmem:[%s4] sm:$0x1]
      %v225 = vlaneseq
      %v226 = vshrl.u32 %v225, 7
      %v227 = vsub.s32 0, %v226
      %v228 = vrot.slane %v223, %v227
      %v246 = vunpack.c.l.b16 %v207
      %v247 = vunpack.c.l.b16 %v208
      %v248 = vunpack.c.l.b16 %v209
      %v249 = vunpack.c.l.b16 %v210
      %v250 = vunpack.c.l.b16 %v211
      %v251 = vunpack.c.l.b16 %v212
      %v252 = vunpack.c.l.b16 %v213
      %v253 = vunpack.c.l.b16 %v214
      %v254 = vunpack.c.l.b16 %v215
      %v255 = vunpack.c.l.b16 %v216
      %v256 = vunpack.c.l.b16 %v217
      %v257 = vunpack.c.l.b16 %v218
      %v258 = vunpack.c.l.b16 %v219
      %v259 = vunpack.c.l.b16 %v220
      %v260 = vunpack.c.l.b16 %v221
      %v261 = vunpack.c.l.b16 %v222
      %v262 = vpack.c.b16 %v247, %v246
      %v263 = vpack.c.b16 %v249, %v248
      %v264 = vpack.c.b16 %v251, %v250
      %v265 = vpack.c.b16 %v253, %v252
      %v266 = vpack.c.b16 %v255, %v254
      %v267 = vpack.c.b16 %v257, %v256
      %v268 = vpack.c.b16 %v259, %v258
      %v269 = vpack.c.b16 %v261, %v260
      %278 = vmatprep.subr.bf16.mxu0 0
      %279 = vmatpush1.bf16.msra.mxu0 %v262
      %280 = vmatprep.subr.bf16.mxu0 0
      %281 = vmatpush1.bf16.msra.mxu0 %v263
      %282 = vmatprep.subr.bf16.mxu0 0
      %283 = vmatpush1.bf16.msra.mxu0 %v264
      %284 = vmatprep.subr.bf16.mxu0 0
      %285 = vmatpush1.bf16.msra.mxu0 %v265
      %286 = vmatprep.subr.bf16.mxu0 0
      %287 = vmatpush1.bf16.msra.mxu0 %v266
      %288 = vmatprep.subr.bf16.mxu0 0
      %289 = vmatpush1.bf16.msra.mxu0 %v267
      %290 = vmatprep.subr.bf16.mxu0 0
      %291 = vmatpush1.bf16.msra.mxu0 %v268
      %292 = vmatprep.subr.bf16.mxu0 0
      %293 = vmatpush1.bf16.msra.mxu0 %v269
      %294 = vmatprep.subr.bf16.mxu0 0
      %295 = vmatpush1.bf16.msra.mxu0 0
      %296 = vmatprep.subr.bf16.mxu0 0
      %297 = vmatpush1.bf16.msra.mxu0 0
      %298 = vmatprep.subr.bf16.mxu0 0
      %299 = vmatpush1.bf16.msra.mxu0 0
      %300 = vmatprep.subr.bf16.mxu0 0
      %301 = vmatpush1.bf16.msra.mxu0 0
      %302 = vmatprep.subr.bf16.mxu0 0
      %303 = vmatpush1.bf16.msra.mxu0 0
      %304 = vmatprep.subr.bf16.mxu0 0
      %305 = vmatpush1.bf16.msra.mxu0 0
      %306 = vmatprep.subr.bf16.mxu0 0
      %307 = vmatpush1.bf16.msra.mxu0 0
      %308 = vmatprep.subr.bf16.mxu0 0
      %309 = vmatpush1.bf16.msra.mxu0 0
      %310 = vmatprep.mubr.bf16.mxu0 0
      %311 = vmatmul.mubr.bf16.gmra.mrb[0].mxu0 %v206
      %v312 = vpop.f32.mrb[0].mxu0
      %v313 = vadd.f32 %v228, %v312
      %v314 = vpop.f32.mrb[0].mxu0
      %v315 = vpop.f32.mrb[0].mxu0
      %v316 = vpop.f32.mrb[0].mxu0
      %317 = vdwg.mxu0
      %vm318 = vcmp.gt.f32.partialorder %v313, 20.0
      %v319 = vmin.f32 %v313, 20.0
      %v320 = vmul.f32 %v319, 1.442695
      %v321 = vpow.pop %v320
      %v322 = vadd.f32 %v321, 1.0
      %v323 = vlog2.pop %v322
      %v324 = vmul.f32 %v323, 0.6931472
      %v325 = vmul.f32 -0.5, %v321
      %v326 = vadd.f32 %v325, 1.0
      %v327 = vmul.f32 %v326, %v321
      %v328 = vand.u32 2147483647, %v321
      %vm329 = vcmp.lt.f32.partialorder %v328, 0.0004427343
      %v330 = vsel %vm329, %v327, %v324
      %v331 = vsel %vm318, %v313, %v330
      %v332 = vpack.c.bf16 %v331, %v331
      %v333 = vld [vmem:[#allocation7] sm:$0xff]
      %v334 = vld [vmem:[#allocation7 + $0x8] sm:$0xff]
      %v335 = vld [vmem:[#allocation7 + $0x10] sm:$0xff]
      %v336 = vld [vmem:[#allocation7 + $0x18] sm:$0xff]
      %v337 = vld [vmem:[#allocation7 + $0x20] sm:$0xff]
      %v338 = vld [vmem:[#allocation7 + $0x28] sm:$0xff]
      %v339 = vld [vmem:[#allocation7 + $0x30] sm:$0xff]
      %v340 = vld [vmem:[#allocation7 + $0x38] sm:$0xff]
      %v341 = vld [vmem:[#allocation7 + $0x40] sm:$0xff]
      %v342 = vld [vmem:[#allocation7 + $0x48] sm:$0xff]
      %v343 = vld [vmem:[#allocation7 + $0x50] sm:$0xff]
      %v344 = vld [vmem:[#allocation7 + $0x58] sm:$0xff]
      %v345 = vld [vmem:[#allocation7 + $0x60] sm:$0xff]
      %v346 = vld [vmem:[#allocation7 + $0x68] sm:$0xff]
      %v347 = vld [vmem:[#allocation7 + $0x70] sm:$0xff]
      %v348 = vld [vmem:[#allocation7 + $0x78] sm:$0xff]
      %v349 = vld [vmem:[%s6] sm:$0x3]
      %v351 = vlaneseq
      %v352 = vshrl.u32 %v351, 7
      %v353 = vsub.s32 0, %v352
      %v354 = vrot.slane %v349, %v353
      %v355 = vlaneseq
      %v356 = vshrl.u32 %v355, 7
      %v357 = vsub.s32 1, %v356
      %v358 = vrot.slane %v349, %v357
      %v377 = vunpack.c.l.b16 %v333
      %v378 = vunpack.c.h.b16 %v333
      %v379 = vunpack.c.l.b16 %v334
      %v380 = vunpack.c.h.b16 %v334
      %v381 = vunpack.c.l.b16 %v335
      %v382 = vunpack.c.h.b16 %v335
      %v383 = vunpack.c.l.b16 %v336
      %v384 = vunpack.c.h.b16 %v336
      %v385 = vunpack.c.l.b16 %v337
      %v386 = vunpack.c.h.b16 %v337
      %v387 = vunpack.c.l.b16 %v338
      %v388 = vunpack.c.h.b16 %v338
      %v389 = vunpack.c.l.b16 %v339
      %v390 = vunpack.c.h.b16 %v339
      %v391 = vunpack.c.l.b16 %v340
      %v392 = vunpack.c.h.b16 %v340
      %v393 = vunpack.c.l.b16 %v341
      %v394 = vunpack.c.h.b16 %v341
      %v395 = vunpack.c.l.b16 %v342
      %v396 = vunpack.c.h.b16 %v342
      %v397 = vunpack.c.l.b16 %v343
      %v398 = vunpack.c.h.b16 %v343
      %v399 = vunpack.c.l.b16 %v344
      %v400 = vunpack.c.h.b16 %v344
      %v401 = vunpack.c.l.b16 %v345
      %v402 = vunpack.c.h.b16 %v345
      %v403 = vunpack.c.l.b16 %v346
      %v404 = vunpack.c.h.b16 %v346
      %v405 = vunpack.c.l.b16 %v347
      %v406 = vunpack.c.h.b16 %v347
      %v407 = vunpack.c.l.b16 %v348
      %v408 = vunpack.c.h.b16 %v348
      %v409 = vpack.c.b16 %v379, %v377
      %v410 = vpack.c.b16 %v380, %v378
      %v411 = vpack.c.b16 %v383, %v381
      %v412 = vpack.c.b16 %v384, %v382
      %v413 = vpack.c.b16 %v387, %v385
      %v414 = vpack.c.b16 %v388, %v386
      %v415 = vpack.c.b16 %v391, %v389
      %v416 = vpack.c.b16 %v392, %v390
      %v417 = vpack.c.b16 %v395, %v393
      %v418 = vpack.c.b16 %v396, %v394
      %v419 = vpack.c.b16 %v399, %v397
      %v420 = vpack.c.b16 %v400, %v398
      %v421 = vpack.c.b16 %v403, %v401
      %v422 = vpack.c.b16 %v404, %v402
      %v423 = vpack.c.b16 %v407, %v405
      %v424 = vpack.c.b16 %v408, %v406
      %441 = vmatprep.subr.bf16.mxu0 %v410
      %442 = vmatpush1.bf16.msra.mxu0 %v409
      %443 = vmatprep.subr.bf16.mxu0 %v412
      %444 = vmatpush1.bf16.msra.mxu0 %v411
      %445 = vmatprep.subr.bf16.mxu0 %v414
      %446 = vmatpush1.bf16.msra.mxu0 %v413
      %447 = vmatprep.subr.bf16.mxu0 %v416
      %448 = vmatpush1.bf16.msra.mxu0 %v415
      %449 = vmatprep.subr.bf16.mxu0 %v418
      %450 = vmatpush1.bf16.msra.mxu0 %v417
      %451 = vmatprep.subr.bf16.mxu0 %v420
      %452 = vmatpush1.bf16.msra.mxu0 %v419
      %453 = vmatprep.subr.bf16.mxu0 %v422
      %454 = vmatpush1.bf16.msra.mxu0 %v421
      %455 = vmatprep.subr.bf16.mxu0 %v424
      %456 = vmatpush1.bf16.msra.mxu0 %v423
      %457 = vmatprep.subr.bf16.mxu0 0
      %458 = vmatpush1.bf16.msra.mxu0 0
      %459 = vmatprep.subr.bf16.mxu0 0
      %460 = vmatpush1.bf16.msra.mxu0 0
      %461 = vmatprep.subr.bf16.mxu0 0
      %462 = vmatpush1.bf16.msra.mxu0 0
      %463 = vmatprep.subr.bf16.mxu0 0
      %464 = vmatpush1.bf16.msra.mxu0 0
      %465 = vmatprep.subr.bf16.mxu0 0
      %466 = vmatpush1.bf16.msra.mxu0 0
      %467 = vmatprep.subr.bf16.mxu0 0
      %468 = vmatpush1.bf16.msra.mxu0 0
      %469 = vmatprep.subr.bf16.mxu0 0
      %470 = vmatpush1.bf16.msra.mxu0 0
      %471 = vmatprep.subr.bf16.mxu0 0
      %472 = vmatpush1.bf16.msra.mxu0 0
      %473 = vmatprep.mubr.bf16.mxu0 0
      %474 = vmatmul.mubr.bf16.gmra.mrb[0].mxu0 %v332
      %v475 = vpop.f32.mrb[0].mxu0
      %v476 = vadd.f32 %v354, %v475
      %v477 = vpop.f32.mrb[0].mxu0
      %v478 = vadd.f32 %v358, %v477
      %v479 = vpop.f32.mrb[0].mxu0
      %v480 = vpop.f32.mrb[0].mxu0
      %481 = vdwg.mxu0
      %482 = vst [vmem:[%s7] sm:$0xff] %v476
      %v483 = vmul.f32 %v478, 0.5
      %v484 = vmul.f32 %v483, 1.442695
      %v485 = vpow.pop %v484
      %486 = vst [vmem:[%s7 + $0x8] sm:$0xff] %v485
    $region49: #{encoder_forward.1} parent=1 // pred_fallthru
      _
    // Predicated region
    $region50: #{encoder_forward.1} parent=1 // pred_check
      _
    $region51: #{encoder_forward.1} parent=1 // pred_check_branch
      %488 = sbr.rel (0) target = $region53
    $region52: #{encoder_forward.1} parent=1 // pred_region
      _
    $region53: #{encoder_forward.1} parent=1 // pred_fallthru
      _
    // Predicated region
    $region54: #{encoder_forward.1} parent=1 // pred_check
      _
    $region55: #{encoder_forward.1} parent=1 // pred_check_branch
      %490 = sbr.rel (0) target = $region57
    $region56: #{encoder_forward.1} parent=1 // pred_region
      _
    $region57: #{encoder_forward.1} parent=1 // pred_fallthru
      _
    %491 = vsyncpa [#allocation4], 1
    %492 = vsyncpa [#allocation6], 1

</llo_original>
